<compile_context>
chip_gen: v6e
topology: v6e:2x2x1
jax: 0.10.0
libtpu: 0.0.40
codegen_flags: <defaults>
</compile_context>

<pallas_src>
import functools

import numpy as np
import jax
import jax.numpy as jnp
from jax import lax
from jax.experimental import pallas as pl
from jax.experimental.pallas import tpu as pltpu

_LANE = 128
_SUBLANE = 8
_GATHER_SLOTS = 8          # in-flight row DMAs per grid step (gather path)


def _round_up(x, m):
    return ((x + m - 1) // m) * m


def _vmem_capacity_bytes():
    """Physical per-core VMEM; conservative 64 MiB (v7x) if the query fails."""
    try:
        return int(pltpu.get_tpu_info().vmem_capacity_bytes)
    except Exception:
        return 64 * 1024 * 1024


# ---------------------------------------------------------------------------
# Small-vocab path: fused one-hot matmul against a block-diagonal table.
# ---------------------------------------------------------------------------

def _onehot_matmul_kernel(idx_ref, table_ref, out_ref, *, chunk, exact):
    """idx_ref  : (block_rows, nb_emb) int32, ids pre-shifted by vocab offsets.
       table_ref: (v_total, h_pad) block-diagonal combined table (bf16/f32).
       out_ref  : (block_rows, h_pad) concat of all feature embeddings."""
    block_rows, nb_emb = idx_ref.shape
    v_total = table_ref.shape[0]
    n_chunks = block_rows // chunk

    dot_kwargs = dict(preferred_element_type=jnp.float32)
    if exact:
        dot_kwargs["precision"] = jax.lax.Precision.HIGHEST

    def body(c, carry):
        r0 = pl.multiple_of(c * chunk, chunk)
        ids = idx_ref[pl.ds(r0, chunk), :]                       # (chunk, nb_emb)
        iota = lax.broadcasted_iota(jnp.int32, (chunk, v_total), 1)
        # Boolean OR-accumulated multi-hot; single cast at the end (VALU-light).
        hot = iota == ids[:, 0:1]
        for i in range(1, nb_emb):
            hot = jnp.logical_or(hot, iota == ids[:, i:i + 1])
        # Block-diagonal table => multi_hot @ W == concat_i(onehot_i @ W_i).
        emb = jnp.dot(hot.astype(table_ref.dtype), table_ref[...], **dot_kwargs)
        out_ref[pl.ds(r0, chunk), :] = emb.astype(out_ref.dtype)  # lane-dense vst
        return carry

    lax.fori_loop(0, n_chunks, body, 0, unroll=True)


def _onehot_forward(indices, W, voffs_arr, maxv, *, v_total, h_total, h_pad,
                    out_dtype, vmem_cap, exact, block_rows):
    seq_len, batch, nb_emb = indices.shape
    n_rows = seq_len * batch
    idx2d = indices.reshape(n_rows, nb_emb).astype(jnp.int32)
    idx2d = jnp.clip(idx2d, 0, maxv[None, :]) + voffs_arr[None, :]

    t_item = np.dtype(W.dtype).itemsize
    o_item = np.dtype(out_dtype).itemsize
    v_sub = _round_up(v_total, _SUBLANE)
    v_lane = _round_up(v_total, _LANE)
    budget = max(int(0.85 * vmem_cap), 16 << 20)

    def vmem_needed(br, chunk):
        return (2 * v_sub * h_pad * t_item          # resident table (2 bufs worst case)
                + 2 * br * h_pad * o_item           # double-buffered output blocks
                + 2 * br * _LANE * 4                # index blocks (lane-padded int32)
                + 2 * chunk * v_lane * 4)           # in-flight one-hot / partials

    row_cap = _round_up(n_rows, _SUBLANE)
    if block_rows is not None:
        br = max(_SUBLANE, _round_up(int(block_rows), _SUBLANE))
        chunk = 256 if br % 256 == 0 else br
    else:
        br, chunk = _SUBLANE, _SUBLANE
        for cand in (1024, 512, 256, 128, 64, 32, 16, 8):
            ch = 256 if cand % 256 == 0 else cand
            if cand <= row_cap and vmem_needed(cand, ch) <= budget:
                br, chunk = cand, ch
                break

    n_pad = pl.cdiv(n_rows, br) * br
    if n_pad != n_rows:
        idx2d = jnp.pad(idx2d, ((0, n_pad - n_rows), (0, 0)))
    grid = (n_pad // br,)

    vmem_limit = int(min(max(vmem_needed(br, chunk), 32 << 20), budget))

    kernel = functools.partial(_onehot_matmul_kernel, chunk=chunk, exact=exact)
    out2d = pl.pallas_call(
        kernel,
        out_shape=jax.ShapeDtypeStruct((n_pad, h_pad), out_dtype),
        grid=grid,
        in_specs=[
            pl.BlockSpec((br, nb_emb), lambda r: (r, 0)),
            # Grid-invariant combined table (constant block index).
            pl.BlockSpec((v_total, h_pad), lambda r: (0, 0)),
        ],
        out_specs=pl.BlockSpec((br, h_pad), lambda r: (r, 0)),
        compiler_params=pltpu.CompilerParams(
            dimension_semantics=("parallel",),
            vmem_limit_bytes=vmem_limit),
    )(idx2d, W)

    return out2d[:n_rows, :h_total].reshape(seq_len, batch, h_total)


# ---------------------------------------------------------------------------
# Large-vocab path: per-feature DMA row-gather (table stays in HBM).
# ---------------------------------------------------------------------------

def _gather_kernel(ids_ref, tbl_ref, out_ref, buf_ref, sem, *, nslots):
    """ids_ref: SMEM (n_pad,) int32 row ids (scalar-prefetched, clamped).
       tbl_ref: (V, h_pad) table left in HBM (memory_space=pl.ANY).
       out_ref: (br, h_pad) output block; buf_ref: same-shape VMEM scratch."""
    tile = pl.program_id(0)
    br = out_ref.shape[0]
    base = tile * br

    def issue(r, carry):
        slot = r % nslots

        @pl.when(r >= nslots)
        def _():
            # Recycle the slot: wait for the copy issued `nslots` rows ago
            # (wait descriptor only needs matching size + semaphore).
            pltpu.make_async_copy(tbl_ref.at[pl.ds(0, 1), :],
                                  buf_ref.at[pl.ds(0, 1), :],
                                  sem.at[slot]).wait()

        row = ids_ref[base + r]
        pltpu.make_async_copy(tbl_ref.at[pl.ds(row, 1), :],
                              buf_ref.at[pl.ds(r, 1), :],
                              sem.at[slot]).start()
        return carry

    lax.fori_loop(0, br, issue, 0)

    def drain(s, carry):
        pltpu.make_async_copy(tbl_ref.at[pl.ds(0, 1), :],
                              buf_ref.at[pl.ds(0, 1), :],
                              sem.at[s]).wait()
        return carry

    lax.fori_loop(0, min(br, nslots), drain, 0)
    out_ref[...] = buf_ref[...]


def _gather_forward(indices, padded_tables, maxv, *, hidden_sizes, out_dtype,
                    block_rows):
    seq_len, batch, nb_emb = indices.shape
    n_rows = seq_len * batch
    idx2d = indices.reshape(n_rows, nb_emb).astype(jnp.int32)
    idx2d = jnp.clip(idx2d, 0, maxv[None, :])

    br = 128 if block_rows is None else max(_SUBLANE,
                                            _round_up(int(block_rows), _SUBLANE))
    br = min(br, _round_up(n_rows, _SUBLANE))
    n_pad = pl.cdiv(n_rows, br) * br

    pieces = []
    for i, tbl in enumerate(padded_tables):
        ids = idx2d[:, i]
        if n_pad != n_rows:
            ids = jnp.pad(ids, (0, n_pad - n_rows))
        h_pad = tbl.shape[1]
        out = pl.pallas_call(
            functools.partial(_gather_kernel, nslots=_GATHER_SLOTS),
            out_shape=jax.ShapeDtypeStruct((n_pad, h_pad), out_dtype),
            grid_spec=pltpu.PrefetchScalarGridSpec(
                num_scalar_prefetch=1,
                grid=(n_pad // br,),
                in_specs=[pl.BlockSpec(memory_space=pl.ANY)],
                out_specs=pl.BlockSpec((br, h_pad), lambda t, ids_ref: (t, 0)),
                scratch_shapes=[pltpu.VMEM((br, h_pad), out_dtype),
                                pltpu.SemaphoreType.DMA((_GATHER_SLOTS,))]),
            compiler_params=pltpu.CompilerParams(
                dimension_semantics=("arbitrary",)),
        )(ids, tbl)
        pieces.append(out[:n_rows, :hidden_sizes[i]])

    h_total = sum(hidden_sizes)
    return jnp.concatenate(pieces, axis=-1).reshape(seq_len, batch, h_total)


# ---------------------------------------------------------------------------
# Public API
# ---------------------------------------------------------------------------

def make_multi_embedding(tables, *, compute_dtype=jnp.bfloat16,
                         block_rows=None, gather_vocab_threshold=1024):
    """Precompute combined/padded tables ONCE and return apply(indices).

    Semantics == MultiEmbedding.forward: indices (seq, batch, nb_emb) ->
    concat_i(embedding_i(indices[..., i])), shape (seq, batch, sum(hidden)).
    `are_trainable`/requires_grad only matter for training (no forward effect).
    Out-of-range ids are clamped (torch would raise).
    """
    tables = [jnp.asarray(t) for t in tables]
    nb_emb = len(tables)
    vocab_sizes = [int(t.shape[0]) for t in tables]
    hidden_sizes = [int(t.shape[1]) for t in tables]
    v_total, h_total = sum(vocab_sizes), sum(hidden_sizes)
    out_dtype = jnp.result_type(*[t.dtype for t in tables])
    vmem_cap = _vmem_capacity_bytes()

    h_pad = _round_up(h_total, _LANE)
    table_vmem = (2 * _round_up(v_total, _SUBLANE) * h_pad
                  * np.dtype(compute_dtype).itemsize)
    use_gather = (v_total > gather_vocab_threshold
                  or table_vmem > int(0.5 * 0.85 * vmem_cap))

    if not use_gather:
        # Block-diagonal combined table (built once, hoisted out of the call).
        voffs, hoffs = [0], [0]
        for v in vocab_sizes[:-1]:
            voffs.append(voffs[-1] + v)
        for h in hidden_sizes[:-1]:
            hoffs.append(hoffs[-1] + h)
        W = jnp.zeros((v_total, h_pad), dtype=compute_dtype)
        for i, t in enumerate(tables):
            W = W.at[voffs[i]:voffs[i] + vocab_sizes[i],
                     hoffs[i]:hoffs[i] + hidden_sizes[i]].set(
                         t.astype(compute_dtype))
        voffs_arr = jnp.array(voffs, jnp.int32)
        maxv = jnp.array(vocab_sizes, jnp.int32) - 1
        exact = np.dtype(compute_dtype) == np.dtype(jnp.float32)

        @jax.jit
        def _apply(indices, W, voffs_arr, maxv):
            return _onehot_forward(indices, W, voffs_arr, maxv,
                                   v_total=v_total, h_total=h_total,
                                   h_pad=h_pad, out_dtype=out_dtype,
                                   vmem_cap=vmem_cap, exact=exact,
                                   block_rows=block_rows)

        return lambda indices: _apply(indices, W, voffs_arr, maxv)

    # Large combined vocab: keep tables in HBM, gather rows by DMA (exact).
    padded_tables = []
    for t, h in zip(tables, hidden_sizes):
        hp = _round_up(h, _LANE)
        tp = t.astype(out_dtype)
        if hp != h:
            tp = jnp.pad(tp, ((0, 0), (0, hp - h)))
        padded_tables.append(tp)
    padded_tables = tuple(padded_tables)
    maxv = jnp.array(vocab_sizes, jnp.int32) - 1

    @jax.jit
    def _apply(indices, padded_tables, maxv):
        return _gather_forward(indices, padded_tables, maxv,
                               hidden_sizes=tuple(hidden_sizes),
                               out_dtype=out_dtype, block_rows=block_rows)

    return lambda indices: _apply(indices, padded_tables, maxv)


def multi_embedding(indices, tables, **kwargs):
    """One-shot convenience wrapper (prefer make_multi_embedding for reuse)."""
    return make_multi_embedding(tables, **kwargs)(indices)


def multi_embedding_ref(indices, tables):
    """Pure-JAX reference (== torch: cat([emb_i(x[..., i])], dim=-1))."""
    outs = [jnp.take(t, indices[..., i], axis=0) for i, t in enumerate(tables)]
    return jnp.concatenate(outs, axis=-1)


if __name__ == "__main__":
    # ---- Small-vocab config (fused one-hot matmul path) -------------------
    vocab_sizes = [11, 7]
    hidden_sizes = [32, 96]            # concat hidden = 128
    seq_len, batch = 8, 2
    nb_embeddings = len(vocab_sizes)

    key = jax.random.PRNGKey(0)
    keys = jax.random.split(key, nb_embeddings + 1)
    tables = [jax.random.normal(keys[i], (vocab_sizes[i], hidden_sizes[i]),
                                dtype=jnp.float32)
              for i in range(nb_embeddings)]
    # are_trainable (requires_grad) is a training-time flag; no forward effect.

    maxvals = jnp.array(vocab_sizes, dtype=jnp.int32)
    u = jax.random.uniform(keys[-1], (seq_len, batch, nb_embeddings))
    input_t = jnp.minimum((u * maxvals[None, None, :]).astype(jnp.int32),
                          maxvals - 1)

    emb = make_multi_embedding(tables)                       # bf16 MXU path
    out = jax.block_until_ready(emb(input_t))
    ref = multi_embedding_ref(input_t, tables)
    assert out.shape == (seq_len, batch, sum(hidden_sizes)), out.shape
    # bf16 table rounding only (the one-hot selects exact rows): ~2^-8 rel.
    assert jnp.allclose(out, ref, rtol=2e-2, atol=2e-2), "mismatch (bf16 path)"

    # Exact-precision variant of the same path (f32 operands, HIGHEST).
    emb_exact = make_multi_embedding(tables, compute_dtype=jnp.float32)
    out_x = jax.block_until_ready(emb_exact(input_t))
    assert jnp.allclose(out_x, ref, atol=1e-5, rtol=1e-5), "mismatch (exact path)"

    # Padded / multi-grid-step path (row count not a tile multiple).
    u2 = jax.random.uniform(jax.random.PRNGKey(1), (24, 3, nb_embeddings))
    input_t2 = jnp.minimum((u2 * maxvals[None, None, :]).astype(jnp.int32),
                           maxvals - 1)
    out2 = jax.block_until_ready(
        make_multi_embedding(tables, block_rows=64)(input_t2))
    ref2 = multi_embedding_ref(input_t2, tables)
    assert jnp.allclose(out2, ref2, rtol=2e-2, atol=2e-2), "mismatch (padded)"

    # ---- Large-vocab config (per-feature DMA row-gather path, exact) ------
    vocab_l = [2000, 1200]             # combined vocab 3200 > threshold
    hidden_l = [64, 96]
    keys_l = jax.random.split(jax.random.PRNGKey(2), len(vocab_l) + 1)
    tables_l = [jax.random.normal(keys_l[i], (vocab_l[i], hidden_l[i]),
                                  dtype=jnp.float32)
                for i in range(len(vocab_l))]
    maxv_l = jnp.array(vocab_l, dtype=jnp.int32)
    u3 = jax.random.uniform(keys_l[-1], (seq_len, batch, len(vocab_l)))
    input_l = jnp.minimum((u3 * maxv_l[None, None, :]).astype(jnp.int32),
                          maxv_l - 1)
    out_l = jax.block_until_ready(make_multi_embedding(tables_l)(input_l))
    ref_l = multi_embedding_ref(input_l, tables_l)
    assert out_l.shape == (seq_len, batch, sum(hidden_l)), out_l.shape
    assert jnp.allclose(out_l, ref_l, atol=1e-6, rtol=1e-6), "mismatch (gather)"

    print("KERNEL_OK")
</pallas_src>

<mosaic_0001>
module attributes {stable_mosaic.version = 11 : i64} {
  func.func @_onehot_matmul_kernel(%arg0: i32, %arg1: memref<16x2xi32, #tpu.memory_space<vmem>>, %arg2: memref<18x128xbf16, #tpu.memory_space<vmem>>, %arg3: memref<16x128xf32, #tpu.memory_space<vmem>>) attributes {dimension_semantics = [#tpu.dimension_semantics<parallel>], iteration_bounds = array<i64: 1>, scalar_prefetch = 0 : i64, scratch_operands = 0 : i64, tpu.core_type = #tpu.core_type<tc>, window_params = [{transform_indices = @transform_0, window_bounds = array<i64: 16, 2>}, {pipeline_mode = #tpu.pipeline_mode<synchronous>, transform_indices = @transform_1, window_bounds = array<i64: 18, 128>}, {transform_indices = @transform_2, window_bounds = array<i64: 16, 128>}]} {
    %c0_i32 = arith.constant 0 : i32
    %c16_i32 = arith.constant 16 : i32
    %0 = arith.muli %c0_i32, %c16_i32 : i32
    %1 = tpu.assume_multiple %0, 16 : i32
    %2 = arith.index_cast %1 : i32 to index
    %c0 = arith.constant 0 : index
    %3 = vector.load %arg1[%2, %c0] : memref<16x2xi32, #tpu.memory_space<vmem>>, vector<16x2xi32>
    %4 = tpu.iota {dimensions = array<i32: 1>} : vector<16x18xi32>
    %5 = vector.extract_strided_slice %3 {offsets = [0, 0], sizes = [16, 1], strides = [1, 1]} : vector<16x2xi32> to vector<16x1xi32>
    %6 = vector.broadcast %5 : vector<16x1xi32> to vector<16x18xi32>
    %7 = arith.cmpi eq, %4, %6 : vector<16x18xi32>
    %8 = vector.extract_strided_slice %3 {offsets = [0, 1], sizes = [16, 1], strides = [1, 1]} : vector<16x2xi32> to vector<16x1xi32>
    %9 = vector.broadcast %8 : vector<16x1xi32> to vector<16x18xi32>
    %10 = arith.cmpi eq, %4, %9 : vector<16x18xi32>
    %11 = arith.ori %7, %10 : vector<16x18xi1>
    %12 = arith.extui %11 : vector<16x18xi1> to vector<16x18xi32>
    %13 = arith.sitofp %12 : vector<16x18xi32> to vector<16x18xf32>
    %14 = arith.truncf %13 : vector<16x18xf32> to vector<16x18xbf16>
    %c0_0 = arith.constant 0 : index
    %c0_1 = arith.constant 0 : index
    %15 = vector.load %arg2[%c0_0, %c0_1] : memref<18x128xbf16, #tpu.memory_space<vmem>>, vector<18x128xbf16>
    %cst = arith.constant dense<0.000000e+00> : vector<16x128xf32>
    %16 = tpu.matmul %14, %15, %cst {dimension_numbers = #tpu.dot_dimension_numbers<[1], [0], [0], [1], [0, 0, 1, 1], [], []>} : vector<16x18xbf16>, vector<18x128xbf16>, vector<16x128xf32> -> vector<16x128xf32>
    %17 = arith.index_cast %1 : i32 to index
    %c0_2 = arith.constant 0 : index
    %18 = vector.load %arg3[%17, %c0_2] : memref<16x128xf32, #tpu.memory_space<vmem>>, vector<16x128xf32>
    tpu.vector_store %arg3[%17, %c0_2], %16 {strides = array<i32>} : memref<16x128xf32, #tpu.memory_space<vmem>>, vector<16x128xf32>,
    %c1_i32 = arith.constant 1 : i32
    return
  }
  func.func @transform_0(%arg0: i32) -> (i32, i32) {
    %c0_i32 = arith.constant 0 : i32
    %c0_i32_0 = arith.constant 0 : i32
    return %arg0, %c0_i32 : i32, i32
  }
  func.func @transform_1(%arg0: i32) -> (i32, i32) {
    %c0_i32 = arith.constant 0 : i32
    %c0_i32_0 = arith.constant 0 : i32
    %c0_i32_1 = arith.constant 0 : i32
    return %c0_i32, %c0_i32_0 : i32, i32
  }
  func.func @transform_2(%arg0: i32) -> (i32, i32) {
    %c0_i32 = arith.constant 0 : i32
    %c0_i32_0 = arith.constant 0 : i32
    return %arg0, %c0_i32 : i32, i32
  }
}

</mosaic_0001>

<llo_original>
// kernel: _apply.1
$region0: #{_apply.1}
  #allocation0 [shape = 'u32[]', space=smem, size = 0x4, offset = 0x4, fixed_abs, tag = 'smem constant byte address 0x4 - core index']
  #allocation1 [shape = 'u32[144,128]{1,0:T(1,128)}', space=vmem, size = 0x12000, scoped, tag = 'internal scratch']
  %s0 = inlined_call_operand.vmem [shape: s32[16,2], index: 0, kind: input, shape index: {}]
  %s1 = inlined_call_operand.vmem [shape: bf16[18,128], index: 1, kind: input, shape index: {}]
  %s2 = inlined_call_operand.hbm [shape: f32[16,128], index: 2, kind: output, shape index: {}]
  %s3 = sld [smem:[#allocation0]]
  $region18: #{_apply.1} parent=0
    _
  %s5 = ssub.s32 1, %s3
  %s6 = scalar_select 0, %s5, %s3
  $region1: #{_apply.1} parent=0
    #allocation2 [shape = 'u8[8192]{0}', space=vmem, size = 0x2000, scoped, tag = 'output window, operand 0, single buffered']
    #allocation3 [shape = 's32[1]{0}', space=sflag, size = 0x4, scoped, tag = 'scoped memory for _apply.1']
    %7 = vsyncpa [#allocation3], 0
    // Predicated region
    $region2: #{_apply.1} parent=1 // pred_check
      _
    $region3: #{_apply.1} parent=1 // pred_check_branch
      %9 = sbr.rel (0) target = $region5
    $region4: #{_apply.1} parent=1 // pred_region
      _
    $region5: #{_apply.1} parent=1 // pred_fallthru
      _
    // Predicated region
    $region6: #{_apply.1} parent=1 // pred_check
      _
    $region7: #{_apply.1} parent=1 // pred_check_branch
      %11 = sbr.rel (0) target = $region9
    $region8: #{_apply.1} parent=1 // pred_region
      _
    $region9: #{_apply.1} parent=1 // pred_fallthru
      _
    %v13 = vld [vmem:[%s0] sm:$0xff]
    %v14 = vld [vmem:[%s0 + $0x8] sm:$0xff]
    %v15 = vlaneseq
    %v16 = vand.u32 %v15, 127
    %17 = vset.pattern.permute.xlu0 0
    %18 = vperm.xlu0 %17, %v13
    %v19 = vpop.permute.xlu0 %18
    %20 = vset.pattern.permute.xlu0 0
    %21 = vperm.xlu0 %20, %v14
    %v22 = vpop.permute.xlu0 %21
    %vm23 = vcmp.eq.s32.totalorder %v16, %v19
    %vm24 = vcmp.eq.s32.totalorder %v16, %v22
    %25 = vset.pattern.permute.xlu0 1
    %26 = vperm.xlu0 %25, %v13
    %v27 = vpop.permute.xlu0 %26
    %28 = vset.pattern.permute.xlu0 1
    %29 = vperm.xlu0 %28, %v14
    %v30 = vpop.permute.xlu0 %29
    %vm31 = vcmp.eq.s32.totalorder %v16, %v27
    %vm32 = vcmp.eq.s32.totalorder %v16, %v30
    %vm33 = vmor %vm23, %vm31
    %vm34 = vmor %vm24, %vm32
    %v35 = vsel %vm33, 1, 0
    %v36 = vsel %vm34, 1, 0
    %v37 = vcvt.s32.f32 %v35
    %v38 = vcvt.s32.f32 %v36
    %v39 = vpack.c.bf16 %v38, %v37
    %v40 = vld [vmem:[%s1] sm:$0xf]
    %v41 = vld [vmem:[%s1 + $0x4] sm:$0xf]
    %v42 = vld [vmem:[%s1 + $0x8] sm:$0x1]
    %v46 = vunpack.c.l.b16 %v40
    %v47 = vunpack.c.l.b16 %v41
    %v48 = vunpack.c.l.b16 %v42
    %v49 = vpack.c.b16 %v47, %v46
    %v50 = vpack.c.b16 %v48, %v48
    %vm52 = vcmask 146432
    %v54 = vsel %vm52, %v39, 0
    %vm56 = vcmask 1040384
    %v58 = vsel %vm56, %v50, 0
    %60 = vmatprep.subr.bf16.mxu0 0
    %61 = vmatpush1.bf16.msra.mxu0 0
    %62 = vmatprep.subr.bf16.mxu0 0
    %63 = vmatpush1.bf16.msra.mxu0 0
    %64 = vmatprep.subr.bf16.mxu0 0
    %65 = vmatpush1.bf16.msra.mxu0 0
    %66 = vmatprep.subr.bf16.mxu0 0
    %67 = vmatpush1.bf16.msra.mxu0 0
    %68 = vmatprep.subr.bf16.mxu0 0
    %69 = vmatpush1.bf16.msra.mxu0 0
    %70 = vmatprep.subr.bf16.mxu0 0
    %71 = vmatpush1.bf16.msra.mxu0 0
    %72 = vmatprep.subr.bf16.mxu0 0
    %73 = vmatpush1.bf16.msra.mxu0 %v58
    %74 = vmatprep.subr.bf16.mxu0 0
    %75 = vmatpush1.bf16.msra.mxu0 %v49
    %76 = vmatprep.subr.bf16.mxu0 0
    %77 = vmatpush2.bf16.msra.mxu0 0
    %78 = vmatprep.subr.bf16.mxu0 0
    %79 = vmatpush2.bf16.msra.mxu0 0
    %80 = vmatprep.subr.bf16.mxu0 0
    %81 = vmatpush2.bf16.msra.mxu0 0
    %82 = vmatprep.subr.bf16.mxu0 0
    %83 = vmatpush2.bf16.msra.mxu0 0
    %84 = vmatprep.subr.bf16.mxu0 0
    %85 = vmatpush2.bf16.msra.mxu0 0
    %86 = vmatprep.subr.bf16.mxu0 0
    %87 = vmatpush2.bf16.msra.mxu0 0
    %88 = vmatprep.subr.bf16.mxu0 0
    %89 = vmatpush2.bf16.msra.mxu0 0
    %90 = vmatprep.subr.bf16.mxu0 0
    %91 = vmatpush2.bf16.msra.mxu0 0
    %92 = vmatprep.mubr.bf16.mxu0 0
    %93 = vmatmul.mubr.bf16.gmra.mxu0 %v54
    %v94 = vpop.f32.mrf.mxu0
    %v95 = vadd.f32 0.0, %v94
    %v96 = vpop.f32.mrf.mxu0
    %v97 = vpop.f32.mrf.mxu0
    %v98 = vadd.f32 0.0, %v97
    %v99 = vpop.f32.mrf.mxu0
    %100 = vdwg.mxu0
    %101 = vst [vmem:[#allocation2] sm:$0xff] %v95
    %102 = vst [vmem:[#allocation2 + $0x8] sm:$0xff] %v98
    // Predicated region
    $region10: #{_apply.1} parent=1 // pred_check
      _
    $region11: #{_apply.1} parent=1 // pred_check_branch
      %104 = sbr.rel (0) target = $region13
    $region12: #{_apply.1} parent=1 // pred_region
      %s106 = ssub.s32 256, 256
      %107 = vsyncadd [#allocation3], %s106
      %s108 = sshll.u32 [#allocation2], 4
      %s109 = int_to_ptr.vmem [resolvable:$true] %s108
      %114 = dma.vmem_to_hbm [thread:$0]  %s109, 256, %s2, [#allocation3], 128, 128, 8
    $region13: #{_apply.1} parent=1 // pred_fallthru
      _
    // Predicated region
    $region14: #{_apply.1} parent=1 // pred_check
      _
    $region15: #{_apply.1} parent=1 // pred_check_branch
      %116 = sbr.rel (0) target = $region17
    $region16: #{_apply.1} parent=1 // pred_region
      %117 = dma.done [#allocation3], 256
    $region17: #{_apply.1} parent=1 // pred_fallthru
      _
    %118 = vsyncpa [#allocation3], 1

</llo_original>
